<compile_context>
chip_gen: v6e
topology: v6e:2x2x1
jax: 0.10.0
libtpu: 0.0.40
codegen_flags: <defaults>
</compile_context>

<pallas_src>
import jax
import jax.numpy as jnp
from jax.experimental import pallas as pl
from jax.experimental.pallas import tpu as pltpu


def _round_up(n: int, m: int) -> int:
    return ((n + m - 1) // m) * m


def _make_kernel(*, L_total, TL, TB, needs_l_mask, compute_dtype):
    def kernel(x_ref, w1_ref, w2_ref, o_ref, acc_ref):
        # x_ref : (TB, K, TL)   input tile, native PyTorch NCL layout (no host transpose)
        # w1_ref: (P_pad, K)    Conv1d weight (size-1 kernel axis squeezed), VMEM-resident
        # w2_ref: (C, P_pad)    Linear weight, zero-padded cols, f32, VMEM-resident
        # o_ref : (TB, C)       softmax output tile (f32)
        # acc_ref:(P_pad, TB)   running f32 sum_l relu(w1 @ x[b, :, l]) per batch
        l = pl.program_id(1)
        n_l = pl.num_programs(1)

        @pl.when(l == 0)
        def _init():
            acc_ref[...] = jnp.zeros_like(acc_ref)

        w1 = w1_ref[...]

        def accumulate(apply_mask):
            if apply_mask:
                col = jax.lax.broadcasted_iota(jnp.int32, (1, TL), 1)
                lane_ok = col < (L_total - l * TL)
            for bb in range(TB):
                # In-VMEM cast (f32 -> bf16 on the VPU): x is read from HBM exactly
                # once in its stored dtype; the MXU runs bf16 with f32 accumulate.
                xb = x_ref[bb].astype(compute_dtype)                       # (K, TL)
                hb = jnp.dot(w1, xb, preferred_element_type=jnp.float32)   # (P_pad, TL)
                hb = jnp.maximum(hb, 0.0)                                  # ReLU
                if apply_mask:
                    hb = jnp.where(lane_ok, hb, 0.0)
                # torch.sum(..., dim=2): lane reduce of this sequence tile, accumulate.
                acc_ref[:, bb:bb + 1] += jnp.sum(hb, axis=1, keepdims=True)

        if needs_l_mask:
            # Only the trailing sequence tile pays for the out-of-range mask.
            is_last = l == n_l - 1

            @pl.when(jnp.logical_not(is_last))
            def _interior():
                accumulate(False)

            @pl.when(is_last)
            def _tail():
                accumulate(True)
        else:
            accumulate(False)

        @pl.when(l == n_l - 1)
        def _finalize():
            # Linear (no bias): logits^T = w2 @ s^T -> (C, TB); no (P_pad, TB)
            # transpose.  Softmax over the class axis, tiny (C, TB) transpose out.
            logits_t = jnp.dot(w2_ref[...], acc_ref[...],
                               preferred_element_type=jnp.float32)          # (C, TB)
            m = jnp.max(logits_t, axis=0, keepdims=True)
            e = jnp.exp(logits_t - m)
            probs_t = e / jnp.sum(e, axis=0, keepdims=True)
            o_ref[...] = jnp.transpose(probs_t).astype(o_ref.dtype)

    return kernel


def neural_network_forward(x, w1, w2, *, compute_dtype=jnp.bfloat16, max_tile_b=8,
                           vmem_limit_bytes=48 * 1024 * 1024,
                           x_tile_budget_bytes=32 * 1024 * 1024):
    """Forward pass of `NeuralNetwork`.

    x : (B, K, L)  -- PyTorch NCL layout, consumed as-is (single HBM read, no copy).
    w1: (P, K)     -- Conv1d(k, p, 1, bias=False) weight with the size-1 axis squeezed.
    w2: (C, P)     -- Linear(p, C, bias=False) weight.
    returns (B, C) softmax probabilities (float32).
    """
    B, K, L = x.shape
    P, Kw = w1.shape
    C, Pw = w2.shape
    assert Kw == K and Pw == P

    # Pad only the hidden dim, and only to the 8-sublane boundary (exact: padded w1
    # rows give zero activations and the matching w2 columns are zero).
    P_pad = _round_up(P, 8)
    w1_p = jnp.zeros((P_pad, K), compute_dtype).at[:P, :].set(w1.astype(compute_dtype))
    w2_p = jnp.zeros((C, P_pad), jnp.float32).at[:, :P].set(w2.astype(jnp.float32))

    # Batch tiling: 8-row tiles (or the whole batch).  For B >= 16 this yields >= 2
    # batch tiles so the "parallel" batch axis load-balances v7x's two TensorCores.
    # (Smaller TB would unbalance less but violates the 8-sublane output block rule.)
    TB = B if B < max_tile_b else max_tile_b
    n_b = pl.cdiv(B, TB)

    # Sequence tiling: TL = L whenever the double-buffered x tile fits the budget
    # (one grid step over L: no mask, minimal init/finalize overhead); otherwise the
    # largest 128-multiple that fits, preferring a divisor of L to kill the mask.
    itemsize = jnp.dtype(x.dtype).itemsize
    bytes_per_l = 2 * TB * K * itemsize                      # double-buffered column cost
    if L <= 128 or bytes_per_l * L <= x_tile_budget_bytes:
        TL = L
    else:
        TL = max(128, (x_tile_budget_bytes // bytes_per_l) // 128 * 128)
        for cand in range(TL, TL // 2 - 1, -128):            # keep >= half the optimal tile
            if cand > 0 and L % cand == 0:
                TL = cand
                break
    n_l = pl.cdiv(L, TL)
    needs_l_mask = (n_l > 1) and (L % TL != 0)

    kernel = _make_kernel(L_total=L, TL=TL, TB=TB, needs_l_mask=needs_l_mask,
                          compute_dtype=compute_dtype)

    # VMEM budget: x double-buffer (<= 32 MiB) + resident weights (+their 2nd buffer,
    # ~0.5 MiB) + (P_pad, TB) accumulator -- comfortably inside the explicit 48 MiB
    # scoped limit, which is valid on v5e/v6e (128 MiB) and v7x (64 MiB physical).
    return pl.pallas_call(
        kernel,
        out_shape=jax.ShapeDtypeStruct((B, C), jnp.float32),
        grid=(n_b, n_l),
        in_specs=[
            pl.BlockSpec((TB, K, TL), lambda b, l: (b, 0, l)),   # x tile, native NCL layout
            pl.BlockSpec((P_pad, K), lambda b, l: (0, 0)),       # w1: VMEM-resident
            pl.BlockSpec((C, P_pad), lambda b, l: (0, 0)),       # w2 (padded): VMEM-resident
        ],
        out_specs=pl.BlockSpec((TB, C), lambda b, l: (b, 0)),
        scratch_shapes=[pltpu.VMEM((P_pad, TB), jnp.float32)],
        compiler_params=pltpu.CompilerParams(
            dimension_semantics=("parallel", "arbitrary"),       # batch across TCs (v7x)
            vmem_limit_bytes=vmem_limit_bytes,
        ),
    )(x, w1_p, w2_p)


def reference_forward(x, w1, w2, compute_dtype=jnp.float32):
    """Pure-JAX reference mirroring the PyTorch forward (with optional input cast)."""
    hp = jax.lax.Precision.HIGHEST
    xc = x.astype(compute_dtype).astype(jnp.float32)
    w1c = w1.astype(compute_dtype).astype(jnp.float32)
    h = jnp.einsum('pk,bkl->bpl', w1c, xc, precision=hp)   # Conv1d k=1, no bias
    h = jnp.maximum(h, 0.0)                                # ReLU
    s = jnp.sum(h, axis=2)                                 # torch.sum(x, dim=2) -> (B, P)
    logits = jnp.dot(s, w2.astype(jnp.float32).T, precision=hp)   # Linear, no bias
    return jax.nn.softmax(logits, axis=1)                  # Softmax(dim=1)


if __name__ == "__main__":
    # --- small smoke test (shapes consistent with the module, scaled down) ---
    B, K, L, P, C = 2, 32, 8, 32, 3
    kx, kw1, kw2 = jax.random.split(jax.random.PRNGKey(0), 3)
    x = jax.random.normal(kx, (B, K, L), dtype=jnp.float32)
    w1 = jax.random.normal(kw1, (P, K), dtype=jnp.float32) * (1.0 / K)   # N(0, 1/k) init
    w2 = jax.random.normal(kw2, (C, P), dtype=jnp.float32)               # N(0, 1) init

    # f32 path (module numerics)
    y32 = jax.block_until_ready(neural_network_forward(x, w1, w2, compute_dtype=jnp.float32))
    y32_ref = reference_forward(x, w1, w2, compute_dtype=jnp.float32)
    assert y32.shape == (B, C)
    assert jnp.allclose(jnp.sum(y32, axis=1), 1.0, atol=1e-5), "softmax rows must sum to 1"
    assert jnp.allclose(y32, y32_ref, atol=1e-5, rtol=1e-5), "f32 path mismatch vs reference"

    # bf16 fast path (default): compare against the bf16-cast reference
    ybf = jax.block_until_ready(neural_network_forward(x, w1, w2))
    ybf_ref = reference_forward(x, w1, w2, compute_dtype=jnp.bfloat16)
    assert jnp.allclose(jnp.sum(ybf, axis=1), 1.0, atol=1e-4)
    assert jnp.allclose(ybf, ybf_ref, atol=3e-3, rtol=3e-3), "bf16 path mismatch vs reference"

    # --- production-like shapes: k=392, p=300 (P_pad=304), 2 batch tiles, TL=L ---
    B2, K2, L2, P2 = 16, 392, 512, 300
    kx2, kw12, kw22 = jax.random.split(jax.random.PRNGKey(1), 3)
    x2 = jax.random.normal(kx2, (B2, K2, L2), dtype=jnp.float32)
    w12 = jax.random.normal(kw12, (P2, K2), dtype=jnp.float32) * (1.0 / K2)
    w22 = jax.random.normal(kw22, (C, P2), dtype=jnp.float32) * 0.05
    y2 = jax.block_until_ready(neural_network_forward(x2, w12, w22))
    y2_ref = reference_forward(x2, w12, w22, compute_dtype=jnp.bfloat16)
    assert y2.shape == (B2, C)
    assert jnp.allclose(jnp.sum(y2, axis=1), 1.0, atol=1e-4)
    assert jnp.allclose(y2, y2_ref, atol=3e-3, rtol=3e-3), "large-shape mismatch vs reference"

    # --- forced sequence tiling + gated trailing-tile mask (tiny x-tile budget) ---
    B3, K3, L3, P3 = 4, 64, 320, 40
    kx3, kw13, kw23 = jax.random.split(jax.random.PRNGKey(2), 3)
    x3 = jax.random.normal(kx3, (B3, K3, L3), dtype=jnp.float32)
    w13 = jax.random.normal(kw13, (P3, K3), dtype=jnp.float32) * (1.0 / K3)
    w23 = jax.random.normal(kw23, (C, P3), dtype=jnp.float32) * 0.05
    tiny_budget = 2 * B3 * K3 * 4 * 128          # -> TL=128, 3 l-tiles, masked tail tile
    y3 = jax.block_until_ready(
        neural_network_forward(x3, w13, w23, x_tile_budget_bytes=tiny_budget))
    y3_ref = reference_forward(x3, w13, w23, compute_dtype=jnp.bfloat16)
    assert jnp.allclose(jnp.sum(y3, axis=1), 1.0, atol=1e-4)
    assert jnp.allclose(y3, y3_ref, atol=3e-3, rtol=3e-3), "tiled/masked path mismatch"

    print("KERNEL_OK")
</pallas_src>

<mosaic_0001>
module attributes {stable_mosaic.version = 11 : i64} {
  func.func @kernel(%arg0: i32, %arg1: i32, %arg2: memref<2x32x8xf32, #tpu.memory_space<vmem>>, %arg3: memref<32x32xf32, #tpu.memory_space<vmem>>, %arg4: memref<3x32xf32, #tpu.memory_space<vmem>>, %arg5: memref<2x3xf32, #tpu.memory_space<vmem>>, %arg6: memref<32x2xf32, #tpu.memory_space<vmem>>) attributes {dimension_semantics = [#tpu.dimension_semantics<parallel>, #tpu.dimension_semantics<arbitrary>], iteration_bounds = array<i64: 1, 1>, scalar_prefetch = 0 : i64, scratch_operands = 1 : i64, tpu.core_type = #tpu.core_type<tc>, window_params = [{transform_indices = @transform_0, window_bounds = array<i64: 2, 32, 8>}, {pipeline_mode = #tpu.pipeline_mode<synchronous>, transform_indices = @transform_1, window_bounds = array<i64: 32, 32>}, {pipeline_mode = #tpu.pipeline_mode<synchronous>, transform_indices = @transform_2, window_bounds = array<i64: 3, 32>}, {transform_indices = @transform_3, window_bounds = array<i64: 2, 3>}]} {
    %c0_i32 = arith.constant 0 : i32
    %0 = arith.cmpi eq, %arg1, %c0_i32 : i32
    %1 = arith.extui %0 : i1 to i32
    %c0_i32_0 = arith.constant 0 : i32
    %2 = arith.cmpi ne, %1, %c0_i32_0 : i32
    scf.if %2 {
      %cst_22 = arith.constant 0.000000e+00 : f32
      %27 = vector.broadcast %cst_22 : f32 to vector<32x2xf32>
      %c0_23 = arith.constant 0 : index
      %c0_24 = arith.constant 0 : index
      %28 = vector.load %arg6[%c0_23, %c0_24] : memref<32x2xf32, #tpu.memory_space<vmem>>, vector<32x2xf32>
      tpu.vector_store %arg6[%c0_23, %c0_24], %27 {strides = array<i32>} : memref<32x2xf32, #tpu.memory_space<vmem>>, vector<32x2xf32>,
    } else {
    }
    %c0 = arith.constant 0 : index
    %c0_1 = arith.constant 0 : index
    %3 = vector.load %arg3[%c0, %c0_1] : memref<32x32xf32, #tpu.memory_space<vmem>>, vector<32x32xf32>
    %c0_2 = arith.constant 0 : index
    %c0_3 = arith.constant 0 : index
    %c0_4 = arith.constant 0 : index
    %4 = vector.load %arg2[%c0_2, %c0_3, %c0_4] : memref<2x32x8xf32, #tpu.memory_space<vmem>>, vector<1x32x8xf32>
    %5 = vector.shape_cast %4 : vector<1x32x8xf32> to vector<32x8xf32>
    %cst = arith.constant dense<0.000000e+00> : vector<32x8xf32>
    %6 = tpu.matmul %3, %5, %cst {dimension_numbers = #tpu.dot_dimension_numbers<[1], [0], [0], [1], [0, 0, 1, 1], [], []>} : vector<32x32xf32>, vector<32x8xf32>, vector<32x8xf32> -> vector<32x8xf32>
    %cst_5 = arith.constant 0.000000e+00 : f32
    %7 = vector.broadcast %cst_5 : f32 to vector<32x8xf32>
    %8 = arith.maximumf %6, %7 : vector<32x8xf32>
    %c0_6 = arith.constant 0 : index
    %c0_7 = arith.constant 0 : index
    %9 = vector.load %arg6[%c0_6, %c0_7] : memref<32x2xf32, #tpu.memory_space<vmem>>, vector<32x1xf32>
    %cst_8 = arith.constant dense<0.000000e+00> : vector<32xf32>
    %10 = vector.multi_reduction <add>, %8, %cst_8 [1] : vector<32x8xf32> to vector<32xf32>
    %11 = vector.shape_cast %10 : vector<32xf32> to vector<32x1xf32>
    %12 = arith.addf %9, %11 : vector<32x1xf32>
    %c0_9 = arith.constant 0 : index
    %c0_10 = arith.constant 0 : index
    %13 = vector.load %arg6[%c0_9, %c0_10] : memref<32x2xf32, #tpu.memory_space<vmem>>, vector<32x1xf32>
    tpu.vector_store %arg6[%c0_9, %c0_10], %12 {strides = array<i32>} : memref<32x2xf32, #tpu.memory_space<vmem>>, vector<32x1xf32>,
    %c1 = arith.constant 1 : index
    %c0_11 = arith.constant 0 : index
    %c0_12 = arith.constant 0 : index
    %14 = vector.load %arg2[%c1, %c0_11, %c0_12] : memref<2x32x8xf32, #tpu.memory_space<vmem>>, vector<1x32x8xf32>
    %15 = vector.shape_cast %14 : vector<1x32x8xf32> to vector<32x8xf32>
    %cst_13 = arith.constant dense<0.000000e+00> : vector<32x8xf32>
    %16 = tpu.matmul %3, %15, %cst_13 {dimension_numbers = #tpu.dot_dimension_numbers<[1], [0], [0], [1], [0, 0, 1, 1], [], []>} : vector<32x32xf32>, vector<32x8xf32>, vector<32x8xf32> -> vector<32x8xf32>
    %cst_14 = arith.constant 0.000000e+00 : f32
    %17 = vector.broadcast %cst_14 : f32 to vector<32x8xf32>
    %18 = arith.maximumf %16, %17 : vector<32x8xf32>
    %c0_15 = arith.constant 0 : index
    %c1_16 = arith.constant 1 : index
    %19 = vector.load %arg6[%c0_15, %c1_16] : memref<32x2xf32, #tpu.memory_space<vmem>>, vector<32x1xf32>
    %cst_17 = arith.constant dense<0.000000e+00> : vector<32xf32>
    %20 = vector.multi_reduction <add>, %18, %cst_17 [1] : vector<32x8xf32> to vector<32xf32>
    %21 = vector.shape_cast %20 : vector<32xf32> to vector<32x1xf32>
    %22 = arith.addf %19, %21 : vector<32x1xf32>
    %c0_18 = arith.constant 0 : index
    %c1_19 = arith.constant 1 : index
    %23 = vector.load %arg6[%c0_18, %c1_19] : memref<32x2xf32, #tpu.memory_space<vmem>>, vector<32x1xf32>
    tpu.vector_store %arg6[%c0_18, %c1_19], %22 {strides = array<i32>} : memref<32x2xf32, #tpu.memory_space<vmem>>, vector<32x1xf32>,
    %c0_i32_20 = arith.constant 0 : i32
    %24 = arith.cmpi eq, %arg1, %c0_i32_20 : i32
    %25 = arith.extui %24 : i1 to i32
    %c0_i32_21 = arith.constant 0 : i32
    %26 = arith.cmpi ne, %25, %c0_i32_21 : i32
    scf.if %26 {
      %c0_22 = arith.constant 0 : index
      %c0_23 = arith.constant 0 : index
      %27 = vector.load %arg4[%c0_22, %c0_23] : memref<3x32xf32, #tpu.memory_space<vmem>>, vector<3x32xf32>
      %c0_24 = arith.constant 0 : index
      %c0_25 = arith.constant 0 : index
      %28 = vector.load %arg6[%c0_24, %c0_25] : memref<32x2xf32, #tpu.memory_space<vmem>>, vector<32x2xf32>
      %cst_26 = arith.constant dense<0.000000e+00> : vector<3x2xf32>
      %29 = tpu.matmul %27, %28, %cst_26 {dimension_numbers = #tpu.dot_dimension_numbers<[1], [0], [0], [1], [0, 0, 1, 1], [], []>} : vector<3x32xf32>, vector<32x2xf32>, vector<3x2xf32> -> vector<3x2xf32>
      %cst_27 = arith.constant dense<0xFF800000> : vector<2xf32>
      %30 = vector.multi_reduction <maximumf>, %29, %cst_27 [0] : vector<3x2xf32> to vector<2xf32>
      %31 = vector.shape_cast %30 : vector<2xf32> to vector<1x2xf32>
      %32 = vector.broadcast %31 : vector<1x2xf32> to vector<3x2xf32>
      %33 = arith.subf %29, %32 : vector<3x2xf32>
      %34 = math.exp %33 : vector<3x2xf32>
      %cst_28 = arith.constant dense<0.000000e+00> : vector<2xf32>
      %35 = vector.multi_reduction <add>, %34, %cst_28 [0] : vector<3x2xf32> to vector<2xf32>
      %36 = vector.shape_cast %35 : vector<2xf32> to vector<1x2xf32>
      %37 = vector.broadcast %36 : vector<1x2xf32> to vector<3x2xf32>
      %38 = arith.divf %34, %37 : vector<3x2xf32>
      %39 = tpu.transpose %38, [1, 0] : vector<3x2xf32> -> vector<2x3xf32>
      %c0_29 = arith.constant 0 : index
      %c0_30 = arith.constant 0 : index
      %40 = vector.load %arg5[%c0_29, %c0_30] : memref<2x3xf32, #tpu.memory_space<vmem>>, vector<2x3xf32>
      tpu.vector_store %arg5[%c0_29, %c0_30], %39 {strides = array<i32>} : memref<2x3xf32, #tpu.memory_space<vmem>>, vector<2x3xf32>,
    } else {
    }
    return
  }
  func.func @transform_0(%arg0: i32, %arg1: i32) -> (i32, i32, i32) {
    %c0_i32 = arith.constant 0 : i32
    %c0_i32_0 = arith.constant 0 : i32
    return %arg0, %c0_i32, %arg1 : i32, i32, i32
  }
  func.func @transform_1(%arg0: i32, %arg1: i32) -> (i32, i32) {
    %c0_i32 = arith.constant 0 : i32
    %c0_i32_0 = arith.constant 0 : i32
    %c0_i32_1 = arith.constant 0 : i32
    return %c0_i32, %c0_i32_0 : i32, i32
  }
  func.func @transform_2(%arg0: i32, %arg1: i32) -> (i32, i32) {
    %c0_i32 = arith.constant 0 : i32
    %c0_i32_0 = arith.constant 0 : i32
    %c0_i32_1 = arith.constant 0 : i32
    return %c0_i32, %c0_i32_0 : i32, i32
  }
  func.func @transform_3(%arg0: i32, %arg1: i32) -> (i32, i32) {
    %c0_i32 = arith.constant 0 : i32
    %c0_i32_0 = arith.constant 0 : i32
    return %arg0, %c0_i32 : i32, i32
  }
}

</mosaic_0001>

<llo_original>
// kernel: tpu_custom_call.1
$region0: #{tpu_custom_call.1}
  #allocation0 [shape = 'u32[]', space=smem, size = 0x4, offset = 0x4, fixed_abs, tag = 'smem constant byte address 0x4 - core index']
  #allocation1 [shape = 'u32[144,128]{1,0:T(1,128)}', space=vmem, size = 0x12000, scoped, tag = 'internal scratch']
  #allocation2 [shape = 'f32[32,2]{1,0:T(8,128)}', space=vmem, size = 0x4000, scoped, tag = 'scratch operand']
  %s0 = inlined_call_operand.vmem [shape: f32[2,32,8], index: 0, kind: input, shape index: {}]
  %s1 = inlined_call_operand.vmem [shape: f32[32,32], index: 1, kind: input, shape index: {}]
  %s2 = inlined_call_operand.vmem [shape: f32[3,32], index: 2, kind: input, shape index: {}]
  %s3 = inlined_call_operand.hbm [shape: f32[2,3], index: 3, kind: output, shape index: {}]
  %s4 = sld [smem:[#allocation0]]
  $region30: #{tpu_custom_call.1} parent=0
    _
  %s6 = ssub.s32 1, %s4
  %s7 = scalar_select 0, %s6, %s4
  $region1: #{tpu_custom_call.1} parent=0
    #allocation3 [shape = 'u8[1024]{0}', space=vmem, size = 0x400, scoped, tag = 'output window, operand 0, single buffered']
    #allocation4 [shape = 's32[1]{0}', space=sflag, size = 0x4, scoped, tag = 'scoped memory for tpu_custom_call.1']
    %8 = vsyncpa [#allocation4], 0
    // Predicated region
    $region2: #{tpu_custom_call.1} parent=1 // pred_check
      _
    $region3: #{tpu_custom_call.1} parent=1 // pred_check_branch
      %10 = sbr.rel (0) target = $region5
    $region4: #{tpu_custom_call.1} parent=1 // pred_region
      _
    $region5: #{tpu_custom_call.1} parent=1 // pred_fallthru
      _
    // Predicated region
    $region6: #{tpu_custom_call.1} parent=1 // pred_check
      _
    $region7: #{tpu_custom_call.1} parent=1 // pred_check_branch
      %12 = sbr.rel (0) target = $region9
    $region8: #{tpu_custom_call.1} parent=1 // pred_region
      _
    $region9: #{tpu_custom_call.1} parent=1 // pred_fallthru
      _
    // Predicated region
    $region10: #{tpu_custom_call.1} parent=1 // pred_check
      _
    $region11: #{tpu_custom_call.1} parent=1 // pred_check_branch
      %14 = sbr.rel (0) target = $region13
    $region12: #{tpu_custom_call.1} parent=1 // pred_region
      _
    $region13: #{tpu_custom_call.1} parent=1 // pred_fallthru
      _
    %p15 = scmp.eq.s32.totalorder 0, 0
    // Predicated region
    $region14: #{tpu_custom_call.1} parent=1 // pred_check
      %p16 = pneg %p15
    $region15: #{tpu_custom_call.1} parent=1 // pred_check_branch
      %18 = sbr.rel (%p16) target = $region17
    $region16: #{tpu_custom_call.1} parent=1 // pred_region
      %vm19 = vcmask 15360
      %20 = vst.msk [vmem:[#allocation2] sm:$0xff] %vm19, 0.0
      %21 = vst.msk [vmem:[#allocation2 + $0x8] sm:$0xff] %vm19, 0.0
      %22 = vst.msk [vmem:[#allocation2 + $0x10] sm:$0xff] %vm19, 0.0
      %23 = vst.msk [vmem:[#allocation2 + $0x18] sm:$0xff] %vm19, 0.0
    $region17: #{tpu_custom_call.1} parent=1 // pred_fallthru
      _
    %v24 = vld [vmem:[%s1] sm:$0xff]
    %v25 = vld [vmem:[%s1 + $0x8] sm:$0xff]
    %v26 = vld [vmem:[%s1 + $0x10] sm:$0xff]
    %v27 = vld [vmem:[%s1 + $0x18] sm:$0xff]
    %v28 = vld [vmem:[%s0] sm:$0xff]
    %v29 = vld [vmem:[%s0 + $0x8] sm:$0xff]
    %v30 = vld [vmem:[%s0 + $0x10] sm:$0xff]
    %v31 = vld [vmem:[%s0 + $0x18] sm:$0xff]
    %vm32 = vcmask 261120
    %v34 = vsel %vm32, %v24, 0
    %v37 = vsel %vm32, %v25, 0
    %v40 = vsel %vm32, %v26, 0
    %v43 = vsel %vm32, %v27, 0
    %45 = vmatprep.subr.mxu0 0.0
    %46 = vmatpush1.msra.mxu0 0.0
    %47 = vmatprep.subr.mxu0 0.0
    %48 = vmatpush1.msra.mxu0 0.0
    %49 = vmatprep.subr.mxu0 0.0
    %50 = vmatpush1.msra.mxu0 0.0
    %51 = vmatprep.subr.mxu0 0.0
    %52 = vmatpush1.msra.mxu0 0.0
    %53 = vmatprep.subr.mxu0 0.0
    %54 = vmatpush1.msra.mxu0 0.0
    %55 = vmatprep.subr.mxu0 0.0
    %56 = vmatpush1.msra.mxu0 0.0
    %57 = vmatprep.subr.mxu0 0.0
    %58 = vmatpush1.msra.mxu0 0.0
    %59 = vmatprep.subr.mxu0 0.0
    %60 = vmatpush1.msra.mxu0 0.0
    %61 = vmatprep.subr.mxu0 0.0
    %62 = vmatpush1.msra.mxu0 0.0
    %63 = vmatprep.subr.mxu0 0.0
    %64 = vmatpush1.msra.mxu0 0.0
    %65 = vmatprep.subr.mxu0 0.0
    %66 = vmatpush1.msra.mxu0 0.0
    %67 = vmatprep.subr.mxu0 0.0
    %68 = vmatpush1.msra.mxu0 0.0
    %69 = vmatprep.subr.mxu0 0.0
    %70 = vmatpush1.msra.mxu0 %v31
    %71 = vmatprep.subr.mxu0 0.0
    %72 = vmatpush1.msra.mxu0 %v30
    %73 = vmatprep.subr.mxu0 0.0
    %74 = vmatpush1.msra.mxu0 %v29
    %75 = vmatprep.subr.mxu0 0.0
    %76 = vmatpush1.msra.mxu0 %v28
    %77 = vmatprep.subr.mxu0 0.0
    %78 = vmatpush2.msra.mxu0 0.0
    %79 = vmatprep.subr.mxu0 0.0
    %80 = vmatpush2.msra.mxu0 0.0
    %81 = vmatprep.subr.mxu0 0.0
    %82 = vmatpush2.msra.mxu0 0.0
    %83 = vmatprep.subr.mxu0 0.0
    %84 = vmatpush2.msra.mxu0 0.0
    %85 = vmatprep.subr.mxu0 0.0
    %86 = vmatpush2.msra.mxu0 0.0
    %87 = vmatprep.subr.mxu0 0.0
    %88 = vmatpush2.msra.mxu0 0.0
    %89 = vmatprep.subr.mxu0 0.0
    %90 = vmatpush2.msra.mxu0 0.0
    %91 = vmatprep.subr.mxu0 0.0
    %92 = vmatpush2.msra.mxu0 0.0
    %93 = vmatprep.subr.mxu0 0.0
    %94 = vmatpush2.msra.mxu0 0.0
    %95 = vmatprep.subr.mxu0 0.0
    %96 = vmatpush2.msra.mxu0 0.0
    %97 = vmatprep.subr.mxu0 0.0
    %98 = vmatpush2.msra.mxu0 0.0
    %99 = vmatprep.subr.mxu0 0.0
    %100 = vmatpush2.msra.mxu0 0.0
    %101 = vmatprep.subr.mxu0 0.0
    %102 = vmatpush2.msra.mxu0 0.0
    %103 = vmatprep.subr.mxu0 0.0
    %104 = vmatpush2.msra.mxu0 0.0
    %105 = vmatprep.subr.mxu0 0.0
    %106 = vmatpush2.msra.mxu0 0.0
    %107 = vmatprep.subr.mxu0 0.0
    %108 = vmatpush2.msra.mxu0 0.0
    %109 = vmatprep.mubr.f32.mxu0 0.0
    %110 = vmatmul.mubr.f32.gmra.mxu0 %v34
    %v111 = vpop.f32.mrf.mxu0
    %v112 = vadd.f32 0.0, %v111
    %v113 = vpop.f32.mrf.mxu0
    %114 = vmatprep.mubr.f32.mxu0 0.0
    %115 = vmatmul.mubr.f32.gmra.mxu0 %v37
    %v116 = vpop.f32.mrf.mxu0
    %v117 = vadd.f32 0.0, %v116
    %v118 = vpop.f32.mrf.mxu0
    %119 = vmatprep.mubr.f32.mxu0 0.0
    %120 = vmatmul.mubr.f32.gmra.mxu0 %v40
    %v121 = vpop.f32.mrf.mxu0
    %v122 = vadd.f32 0.0, %v121
    %v123 = vpop.f32.mrf.mxu0
    %124 = vmatprep.mubr.f32.mxu0 0.0
    %125 = vmatmul.mubr.f32.gmra.mxu0 %v43
    %v126 = vpop.f32.mrf.mxu0
    %v127 = vadd.f32 0.0, %v126
    %v128 = vpop.f32.mrf.mxu0
    %129 = vdwg.mxu0
    %v130 = vmax.f32 %v112, 0.0
    %v131 = vmax.f32 %v117, 0.0
    %v132 = vmax.f32 %v122, 0.0
    %v133 = vmax.f32 %v127, 0.0
    %v134 = vld [vmem:[#allocation2] sm:$0xff]
    %v135 = vld [vmem:[#allocation2 + $0x8] sm:$0xff]
    %v136 = vld [vmem:[#allocation2 + $0x10] sm:$0xff]
    %v137 = vld [vmem:[#allocation2 + $0x18] sm:$0xff]
    %vm138 = vcmask 64512
    %v139 = vsel %vm138, %v130, 0.0
    %140 = vadd.xlane.f32.xlu0 %v139
    %v141 = vpop.xlane.xlu0 %140
    %v142 = vsel %vm138, %v131, 0.0
    %143 = vadd.xlane.f32.xlu0 %v142
    %v144 = vpop.xlane.xlu0 %143
    %v145 = vsel %vm138, %v132, 0.0
    %146 = vadd.xlane.f32.xlu0 %v145
    %v147 = vpop.xlane.xlu0 %146
    %v148 = vsel %vm138, %v133, 0.0
    %149 = vadd.xlane.f32.xlu0 %v148
    %v150 = vpop.xlane.xlu0 %149
    %v151 = vadd.f32 %v134, %v141
    %v152 = vadd.f32 %v135, %v144
    %v153 = vadd.f32 %v136, %v147
    %v154 = vadd.f32 %v137, %v150
    %vm155 = vcmask 7168
    %156 = vst.msk [vmem:[#allocation2] sm:$0xff] %vm155, %v151
    %157 = vst.msk [vmem:[#allocation2 + $0x8] sm:$0xff] %vm155, %v152
    %158 = vst.msk [vmem:[#allocation2 + $0x10] sm:$0xff] %vm155, %v153
    %159 = vst.msk [vmem:[#allocation2 + $0x18] sm:$0xff] %vm155, %v154
    %s160 = scalar_lea.vmem %s0, 32
    %v161 = vld [vmem:[%s160] sm:$0xff]
    %v162 = vld [vmem:[%s160 + $0x8] sm:$0xff]
    %v163 = vld [vmem:[%s160 + $0x10] sm:$0xff]
    %v164 = vld [vmem:[%s160 + $0x18] sm:$0xff]
    %165 = vmatprep.subr.mxu0 0.0
    %166 = vmatpush1.msra.mxu0 0.0
    %167 = vmatprep.subr.mxu0 0.0
    %168 = vmatpush1.msra.mxu0 0.0
    %169 = vmatprep.subr.mxu0 0.0
    %170 = vmatpush1.msra.mxu0 0.0
    %171 = vmatprep.subr.mxu0 0.0
    %172 = vmatpush1.msra.mxu0 0.0
    %173 = vmatprep.subr.mxu0 0.0
    %174 = vmatpush1.msra.mxu0 0.0
    %175 = vmatprep.subr.mxu0 0.0
    %176 = vmatpush1.msra.mxu0 0.0
    %177 = vmatprep.subr.mxu0 0.0
    %178 = vmatpush1.msra.mxu0 0.0
    %179 = vmatprep.subr.mxu0 0.0
    %180 = vmatpush1.msra.mxu0 0.0
    %181 = vmatprep.subr.mxu0 0.0
    %182 = vmatpush1.msra.mxu0 0.0
    %183 = vmatprep.subr.mxu0 0.0
    %184 = vmatpush1.msra.mxu0 0.0
    %185 = vmatprep.subr.mxu0 0.0
    %186 = vmatpush1.msra.mxu0 0.0
    %187 = vmatprep.subr.mxu0 0.0
    %188 = vmatpush1.msra.mxu0 0.0
    %189 = vmatprep.subr.mxu0 0.0
    %190 = vmatpush1.msra.mxu0 %v164
    %191 = vmatprep.subr.mxu0 0.0
    %192 = vmatpush1.msra.mxu0 %v163
    %193 = vmatprep.subr.mxu0 0.0
    %194 = vmatpush1.msra.mxu0 %v162
    %195 = vmatprep.subr.mxu0 0.0
    %196 = vmatpush1.msra.mxu0 %v161
    %197 = vmatprep.subr.mxu0 0.0
    %198 = vmatpush2.msra.mxu0 0.0
    %199 = vmatprep.subr.mxu0 0.0
    %200 = vmatpush2.msra.mxu0 0.0
    %201 = vmatprep.subr.mxu0 0.0
    %202 = vmatpush2.msra.mxu0 0.0
    %203 = vmatprep.subr.mxu0 0.0
    %204 = vmatpush2.msra.mxu0 0.0
    %205 = vmatprep.subr.mxu0 0.0
    %206 = vmatpush2.msra.mxu0 0.0
    %207 = vmatprep.subr.mxu0 0.0
    %208 = vmatpush2.msra.mxu0 0.0
    %209 = vmatprep.subr.mxu0 0.0
    %210 = vmatpush2.msra.mxu0 0.0
    %211 = vmatprep.subr.mxu0 0.0
    %212 = vmatpush2.msra.mxu0 0.0
    %213 = vmatprep.subr.mxu0 0.0
    %214 = vmatpush2.msra.mxu0 0.0
    %215 = vmatprep.subr.mxu0 0.0
    %216 = vmatpush2.msra.mxu0 0.0
    %217 = vmatprep.subr.mxu0 0.0
    %218 = vmatpush2.msra.mxu0 0.0
    %219 = vmatprep.subr.mxu0 0.0
    %220 = vmatpush2.msra.mxu0 0.0
    %221 = vmatprep.subr.mxu0 0.0
    %222 = vmatpush2.msra.mxu0 0.0
    %223 = vmatprep.subr.mxu0 0.0
    %224 = vmatpush2.msra.mxu0 0.0
    %225 = vmatprep.subr.mxu0 0.0
    %226 = vmatpush2.msra.mxu0 0.0
    %227 = vmatprep.subr.mxu0 0.0
    %228 = vmatpush2.msra.mxu0 0.0
    %229 = vmatprep.mubr.f32.mxu0 0.0
    %230 = vmatmul.mubr.f32.gmra.mxu0 %v34
    %v231 = vpop.f32.mrf.mxu0
    %v232 = vadd.f32 0.0, %v231
    %v233 = vpop.f32.mrf.mxu0
    %234 = vmatprep.mubr.f32.mxu0 0.0
    %235 = vmatmul.mubr.f32.gmra.mxu0 %v37
    %v236 = vpop.f32.mrf.mxu0
    %v237 = vadd.f32 0.0, %v236
    %v238 = vpop.f32.mrf.mxu0
    %239 = vmatprep.mubr.f32.mxu0 0.0
    %240 = vmatmul.mubr.f32.gmra.mxu0 %v40
    %v241 = vpop.f32.mrf.mxu0
    %v242 = vadd.f32 0.0, %v241
    %v243 = vpop.f32.mrf.mxu0
    %244 = vmatprep.mubr.f32.mxu0 0.0
    %245 = vmatmul.mubr.f32.gmra.mxu0 %v43
    %v246 = vpop.f32.mrf.mxu0
    %v247 = vadd.f32 0.0, %v246
    %v248 = vpop.f32.mrf.mxu0
    %249 = vdwg.mxu0
    %v250 = vmax.f32 %v232, 0.0
    %v251 = vmax.f32 %v237, 0.0
    %v252 = vmax.f32 %v242, 0.0
    %v253 = vmax.f32 %v247, 0.0
    %v254 = vld [vmem:[#allocation2] sm:$0xff]
    %v255 = vld [vmem:[#allocation2 + $0x8] sm:$0xff]
    %v256 = vld [vmem:[#allocation2 + $0x10] sm:$0xff]
    %v257 = vld [vmem:[#allocation2 + $0x18] sm:$0xff]
    %v258 = vsel %vm138, %v250, 0.0
    %259 = vadd.xlane.f32.xlu0 %v258
    %v260 = vpop.xlane.xlu0 %259
    %v261 = vsel %vm138, %v251, 0.0
    %262 = vadd.xlane.f32.xlu0 %v261
    %v263 = vpop.xlane.xlu0 %262
    %v264 = vsel %vm138, %v252, 0.0
    %265 = vadd.xlane.f32.xlu0 %v264
    %v266 = vpop.xlane.xlu0 %265
    %v267 = vsel %vm138, %v253, 0.0
    %268 = vadd.xlane.f32.xlu0 %v267
    %v269 = vpop.xlane.xlu0 %268
    %v270 = vadd.f32 %v254, %v260
    %v271 = vadd.f32 %v255, %v263
    %v272 = vadd.f32 %v256, %v266
    %v273 = vadd.f32 %v257, %v269
    %vm274 = vcmask 15368
    %275 = vst.msk [vmem:[#allocation2] sm:$0xff] %vm274, %v270
    %276 = vst.msk [vmem:[#allocation2 + $0x8] sm:$0xff] %vm274, %v271
    %277 = vst.msk [vmem:[#allocation2 + $0x10] sm:$0xff] %vm274, %v272
    %278 = vst.msk [vmem:[#allocation2 + $0x18] sm:$0xff] %vm274, %v273
    // Predicated region
    $region18: #{tpu_custom_call.1} parent=1 // pred_check
      %p279 = pneg %p15
    $region19: #{tpu_custom_call.1} parent=1 // pred_check_branch
      %281 = sbr.rel (%p279) target = $region21
    $region20: #{tpu_custom_call.1} parent=1 // pred_region
      %v282 = vld [vmem:[%s2] sm:$0x7]
      %v283 = vld [vmem:[#allocation2] sm:$0xff]
      %v284 = vld [vmem:[#allocation2 + $0x8] sm:$0xff]
      %v285 = vld [vmem:[#allocation2 + $0x10] sm:$0xff]
      %v286 = vld [vmem:[#allocation2 + $0x18] sm:$0xff]
      %v288 = vsel %vm32, %v282, 0
      %290 = vmatprep.subr.mxu0 0.0
      %291 = vmatpush1.msra.mxu0 0.0
      %292 = vmatprep.subr.mxu0 0.0
      %293 = vmatpush1.msra.mxu0 0.0
      %294 = vmatprep.subr.mxu0 0.0
      %295 = vmatpush1.msra.mxu0 0.0
      %296 = vmatprep.subr.mxu0 0.0
      %297 = vmatpush1.msra.mxu0 0.0
      %298 = vmatprep.subr.mxu0 0.0
      %299 = vmatpush1.msra.mxu0 0.0
      %300 = vmatprep.subr.mxu0 0.0
      %301 = vmatpush1.msra.mxu0 0.0
      %302 = vmatprep.subr.mxu0 0.0
      %303 = vmatpush1.msra.mxu0 0.0
      %304 = vmatprep.subr.mxu0 0.0
      %305 = vmatpush1.msra.mxu0 0.0
      %306 = vmatprep.subr.mxu0 0.0
      %307 = vmatpush1.msra.mxu0 0.0
      %308 = vmatprep.subr.mxu0 0.0
      %309 = vmatpush1.msra.mxu0 0.0
      %310 = vmatprep.subr.mxu0 0.0
      %311 = vmatpush1.msra.mxu0 0.0
      %312 = vmatprep.subr.mxu0 0.0
      %313 = vmatpush1.msra.mxu0 0.0
      %314 = vmatprep.subr.mxu0 0.0
      %315 = vmatpush1.msra.mxu0 %v286
      %316 = vmatprep.subr.mxu0 0.0
      %317 = vmatpush1.msra.mxu0 %v285
      %318 = vmatprep.subr.mxu0 0.0
      %319 = vmatpush1.msra.mxu0 %v284
      %320 = vmatprep.subr.mxu0 0.0
      %321 = vmatpush1.msra.mxu0 %v283
      %322 = vmatprep.subr.mxu0 0.0
      %323 = vmatpush2.msra.mxu0 0.0
      %324 = vmatprep.subr.mxu0 0.0
      %325 = vmatpush2.msra.mxu0 0.0
      %326 = vmatprep.subr.mxu0 0.0
      %327 = vmatpush2.msra.mxu0 0.0
      %328 = vmatprep.subr.mxu0 0.0
      %329 = vmatpush2.msra.mxu0 0.0
      %330 = vmatprep.subr.mxu0 0.0
      %331 = vmatpush2.msra.mxu0 0.0
      %332 = vmatprep.subr.mxu0 0.0
      %333 = vmatpush2.msra.mxu0 0.0
      %334 = vmatprep.subr.mxu0 0.0
      %335 = vmatpush2.msra.mxu0 0.0
      %336 = vmatprep.subr.mxu0 0.0
      %337 = vmatpush2.msra.mxu0 0.0
      %338 = vmatprep.subr.mxu0 0.0
      %339 = vmatpush2.msra.mxu0 0.0
      %340 = vmatprep.subr.mxu0 0.0
      %341 = vmatpush2.msra.mxu0 0.0
      %342 = vmatprep.subr.mxu0 0.0
      %343 = vmatpush2.msra.mxu0 0.0
      %344 = vmatprep.subr.mxu0 0.0
      %345 = vmatpush2.msra.mxu0 0.0
      %346 = vmatprep.subr.mxu0 0.0
      %347 = vmatpush2.msra.mxu0 0.0
      %348 = vmatprep.subr.mxu0 0.0
      %349 = vmatpush2.msra.mxu0 0.0
      %350 = vmatprep.subr.mxu0 0.0
      %351 = vmatpush2.msra.mxu0 0.0
      %352 = vmatprep.subr.mxu0 0.0
      %353 = vmatpush2.msra.mxu0 0.0
      %354 = vmatprep.mubr.f32.mxu0 0.0
      %355 = vmatmul.mubr.f32.gmra.mxu0 %v288
      %v356 = vpop.f32.mrf.mxu0
      %v357 = vadd.f32 0.0, %v356
      %v358 = vpop.f32.mrf.mxu0
      %359 = vdwg.mxu0
      %vm360 = vcmask 10240
      %v361 = vsel %vm360, %v357, -inf
      %v362 = vrot.slane %v361, 4
      %v363 = vmax.f32 %v361, %v362
      %v364 = vrot.slane %v363, 2
      %v365 = vmax.f32 %v363, %v364
      %v366 = vrot.slane %v365, 1
      %v367 = vmax.f32 %v365, %v366
      %v368 = vsub.f32 %v357, %v367
      %v369 = vmul.f32 %v368, 1.442695
      %v370 = vpow.pop %v369
      %v371 = vsel %vm360, %v370, 0.0
      %v372 = vrot.slane %v371, 4
      %v373 = vadd.f32 %v371, %v372
      %v374 = vrot.slane %v373, 2
      %v375 = vadd.f32 %v373, %v374
      %v376 = vrot.slane %v375, 1
      %v377 = vadd.f32 %v375, %v376
      %v378 = vrcp.pop %v377
      %v379 = vmul.f32 %v370, %v378
      %380 = vxpose.xlu0.b32.start [1/16] %v379, 128
      %381 = vxpose.xlu0.b32.cont [2/16] 0.0, 128
      %382 = vxpose.xlu0.b32.cont [3/16] 0.0, 128
      %383 = vxpose.xlu0.b32.cont [4/16] 0.0, 128
      %384 = vxpose.xlu0.b32.cont [5/16] 0.0, 128
      %385 = vxpose.xlu0.b32.cont [6/16] 0.0, 128
      %386 = vxpose.xlu0.b32.cont [7/16] 0.0, 128
      %387 = vxpose.xlu0.b32.cont [8/16] 0.0, 128
      %388 = vxpose.xlu0.b32.cont [9/16] 0.0, 128
      %389 = vxpose.xlu0.b32.cont [10/16] 0.0, 128
      %390 = vxpose.xlu0.b32.cont [11/16] 0.0, 128
      %391 = vxpose.xlu0.b32.cont [12/16] 0.0, 128
      %392 = vxpose.xlu0.b32.cont [13/16] 0.0, 128
      %393 = vxpose.xlu0.b32.cont [14/16] 0.0, 128
      %394 = vxpose.xlu0.b32.cont [15/16] 0.0, 128
      %395 = vxpose.xlu0.b32.end [16/16] 0.0, 128
      %v396 = vpop.trf.xlu0
      %v397 = vpop.trf.xlu0
      %v398 = vpop.trf.xlu0
      %v399 = vpop.trf.xlu0
      %v400 = vpop.trf.xlu0
      %v401 = vpop.trf.xlu0
      %v402 = vpop.trf.xlu0
      %v403 = vpop.trf.xlu0
      %v404 = vpop.trf.xlu0
      %v405 = vpop.trf.xlu0
      %v406 = vpop.trf.xlu0
      %v407 = vpop.trf.xlu0
      %v408 = vpop.trf.xlu0
      %v409 = vpop.trf.xlu0
      %v410 = vpop.trf.xlu0
      %v411 = vpop.trf.xlu0
      %vm412 = vcmask 17408
      %413 = vst.msk [vmem:[#allocation3] sm:$0x3] %vm412, %v396
    $region21: #{tpu_custom_call.1} parent=1 // pred_fallthru
      _
    // Predicated region
    $region22: #{tpu_custom_call.1} parent=1 // pred_check
      _
    $region23: #{tpu_custom_call.1} parent=1 // pred_check_branch
      %415 = sbr.rel (0) target = $region25
    $region24: #{tpu_custom_call.1} parent=1 // pred_region
      %s417 = ssub.s32 32, 32
      %418 = vsyncadd [#allocation4], %s417
      %s420 = sshll.u32 [#allocation3], 4
      %s421 = int_to_ptr.vmem [resolvable:$true] %s420
      %423 = dma.vmem_to_hbm [thread:$0]  %s421, 32, %s3, [#allocation4]
    $region25: #{tpu_custom_call.1} parent=1 // pred_fallthru
      _
    // Predicated region
    $region26: #{tpu_custom_call.1} parent=1 // pred_check
      _
    $region27: #{tpu_custom_call.1} parent=1 // pred_check_branch
      %425 = sbr.rel (0) target = $region29
    $region28: #{tpu_custom_call.1} parent=1 // pred_region
      %426 = dma.done [#allocation4], 32
    $region29: #{tpu_custom_call.1} parent=1 // pred_fallthru
      _
    %427 = vsyncpa [#allocation4], 1

</llo_original>
